<compile_context>
chip_gen: v6e
topology: v6e:2x2x1
jax: 0.10.0
libtpu: 0.0.40
codegen_flags: <defaults>
</compile_context>

<pallas_src>
import functools
import math

import jax
import jax.numpy as jnp
import numpy as np
from jax.experimental import pallas as pl
from jax.experimental.pallas import tpu as pltpu


def _gat_kernel(x_ref, w1_ref, wd_ref, v_ref, adj_ref, adj_diag_ref, bias_ref,
                out_ref, *, alpha):
    """Fused GATConv forward for one batch element (one grid step).

    x_ref        : (N, C_in)    node features for this batch element
    w1_ref       : (C_in, Fp)   W1, zero-padded to Fp lanes
    wd_ref       : (C_in, Fp)   W0 - W1, zero-padded to Fp lanes
    v_ref        : (C_in, 2)    (W0 + W1) @ [a1 | a2]  (hoisted in wrapper)
    adj_ref      : (N, N)       adjacency
    adj_diag_ref : (N, 1)       diag(adj) (hoisted in wrapper)
    bias_ref     : (1, Fp)      bias, zero-padded
    out_ref      : (N, Fp)
    """
    x = x_ref[...]

    # Two separate projections: no lane-subrange slicing of a [W0|W1] result,
    # h0 is never materialized (hp uses h1 and h_diff = h0 - h1 only).
    h1 = jnp.dot(x, w1_ref[...], preferred_element_type=jnp.float32)       # (N, Fp)
    h_diff = jnp.dot(x, wd_ref[...], preferred_element_type=jnp.float32)   # (N, Fp)

    # Attention logit halves: s[:, 0] = h.a1, s[:, 1] = h.a2  (a folded into v).
    s = jnp.dot(x, v_ref[...], preferred_element_type=jnp.float32)         # (N, 2)

    # Outer sum z[i, j] = s1[i] + s2[j] on the MXU via an NT dot_general of
    # [s1 | 1] with [1 | s2]; avoids a per-step (N,1)->(1,N) XLU transpose.
    lane = jax.lax.broadcasted_iota(jnp.int32, s.shape, 1)                  # (N, 2)
    s_a = jnp.where(lane == 0, s, 1.0)                                      # [s1 | 1]
    s_b = jnp.where(lane == 1, s, 1.0)                                      # [1 | s2]
    z = jax.lax.dot_general(s_a, s_b, (((1,), (1,)), ((), ())),
                            preferred_element_type=jnp.float32)             # (N, N)

    # LeakyReLU as a single VPU max (valid for alpha < 1).
    e = jnp.maximum(z, alpha * z)

    # Masked softmax: mask with the reference's -9e15 BEFORE the row-max, so
    # a dominating out-of-mask logit cannot underflow the whole row, and
    # zero-neighbor rows degrade to the reference's uniform 1/N distribution.
    neg = jnp.float32(-9.0e15)
    e = jnp.where(adj_ref[...] > 0, e, neg)
    row_max = jnp.max(e, axis=-1, keepdims=True)                            # (N, 1)
    p = jnp.exp(e - row_max)                                                # (N, N)
    denom = jnp.sum(p, axis=-1, keepdims=True)                              # (N, 1)
    r = pl.reciprocal(denom, approx=True)                                   # EUP slot
    inv = r * (2.0 - denom * r)                                             # Newton step
    att = p * inv                                                           # (N, N)

    # diag(att) analytically (no eye mask, no (N,N) reduce):
    #   e_ii = leakyrelu(s1[i] + s2[i]) if adj[i, i] > 0 else -9e15.
    zd = jnp.sum(s, axis=1, keepdims=True)                                  # (N, 1)
    ed = jnp.maximum(zd, alpha * zd)
    ed = jnp.where(adj_diag_ref[...] > 0, ed, neg)
    diag_att = jnp.exp(ed - row_max) * inv                                  # (N, 1)

    # (att*M) @ h0 + (att*(1-M)) @ h1  ==  att @ h1 + diag(att) * (h0 - h1)
    hp = (jnp.dot(att, h1, preferred_element_type=jnp.float32)
          + diag_att * h_diff)                                              # (N, Fp)

    out_ref[...] = (hp + bias_ref[...]).astype(out_ref.dtype)


def gat_conv(x, adj, W, a, bias, *, alpha=0.2):
    """Pallas forward of GATConv. x: (B, N, C_in) float32 -> (B, N, F)."""
    B, N, c_in = x.shape
    f_out = W.shape[-1]
    # Lane-dense output: pad F up to a multiple of 128 (padded cols stay 0).
    f_pad = ((f_out + 127) // 128) * 128

    # Batch-invariant transforms hoisted out of the kernel.
    w1_p = jnp.zeros((c_in, f_pad), jnp.float32).at[:, :f_out].set(W[1])
    wd_p = jnp.zeros((c_in, f_pad), jnp.float32).at[:, :f_out].set(W[0] - W[1])
    a_mat = a.reshape(2, f_out).T                           # (F, 2) = [a1 | a2]
    v = jnp.dot(W[0] + W[1], a_mat)                         # (C_in, 2)
    bias_p = jnp.zeros((1, f_pad), jnp.float32).at[0, :f_out].set(bias)
    adj_diag = jnp.diagonal(adj).reshape(N, 1)

    kernel = functools.partial(_gat_kernel, alpha=alpha)

    flops = B * (4 * N * c_in * f_pad          # h1, h_diff projections
                 + 4 * N * c_in                # s = x @ v
                 + 4 * N * N                   # outer-sum dot_general
                 + 2 * N * N * f_pad           # att @ h1
                 + 12 * N * N)                 # elementwise softmax/mask work
    cost = pl.CostEstimate(
        flops=flops,
        transcendentals=B * (N * N + N),
        bytes_accessed=4 * (B * N * c_in + B * N * f_pad
                            + 2 * c_in * f_pad + c_in * 2
                            + N * N + N + f_pad),
    )

    out_p = pl.pallas_call(
        kernel,
        out_shape=jax.ShapeDtypeStruct((B, N, f_pad), jnp.float32),
        grid=(B,),
        in_specs=[
            pl.BlockSpec((None, N, c_in), lambda b: (b, 0, 0)),   # x: per-batch
            pl.BlockSpec((c_in, f_pad), lambda b: (0, 0)),        # W1: resident
            pl.BlockSpec((c_in, f_pad), lambda b: (0, 0)),        # W0-W1: resident
            pl.BlockSpec((c_in, 2), lambda b: (0, 0)),            # v: resident
            pl.BlockSpec((N, N), lambda b: (0, 0)),               # adj: resident
            pl.BlockSpec((N, 1), lambda b: (0, 0)),               # diag(adj): resident
            pl.BlockSpec((1, f_pad), lambda b: (0, 0)),           # bias: resident
        ],
        out_specs=pl.BlockSpec((None, N, f_pad), lambda b: (b, 0, 0)),
        compiler_params=pltpu.CompilerParams(
            dimension_semantics=("parallel",)),                   # v7x: 2 TCs split B
        cost_estimate=cost,
    )(x, w1_p, wd_p, v, adj, adj_diag, bias_p)

    return out_p[..., :f_out]


def gat_conv_ref(x, adj, W, a, bias, *, alpha=0.2):
    """Pure-JAX reference mirroring the PyTorch forward exactly."""
    h0 = jnp.einsum("bnc,cf->bnf", x, W[0])
    h1 = jnp.einsum("bnc,cf->bnf", x, W[1])
    h = h0 + h1
    f_out = W.shape[-1]
    a1 = a[:f_out, 0]
    a2 = a[f_out:, 0]
    z = h @ a1[:, None] + jnp.swapaxes(h @ a2[:, None], 1, 2)              # (B, N, N)
    e = jnp.where(z > 0, z, alpha * z)
    att = jnp.where(adj[None] > 0, e, -9.0e15 * jnp.ones_like(e))
    att = jax.nn.softmax(att, axis=2)
    m = jnp.eye(adj.shape[0], dtype=x.dtype)
    h_prime = jnp.einsum("bij,bjf->bif", att * m, h0) + jnp.einsum(
        "bij,bjf->bif", att * (1.0 - m), h1
    )
    return h_prime + bias


if __name__ == "__main__":
    key = jax.random.PRNGKey(0)
    B, N, C_IN, C_OUT = 2, 16, 8, 16
    ALPHA = 0.2

    k_x, k_adj, k_w, k_a, k_b = jax.random.split(key, 5)

    # Input node features.
    x = jax.random.normal(k_x, (B, N, C_IN), dtype=jnp.float32)

    # Deterministic adjacency: random 0/1 with self-loops.
    adj = (jax.random.uniform(k_adj, (N, N)) > 0.5).astype(jnp.float32)
    adj = jnp.maximum(adj, jnp.eye(N, dtype=jnp.float32))

    # Deterministic parameter init (xavier_uniform-style bounds, gain=1.414).
    gain = 1.414
    fan_in_w, fan_out_w = C_IN * C_OUT, 2 * C_OUT
    bound_w = gain * math.sqrt(6.0 / (fan_in_w + fan_out_w))
    W = jax.random.uniform(k_w, (2, C_IN, C_OUT), minval=-bound_w, maxval=bound_w,
                           dtype=jnp.float32)
    bound_a = gain * math.sqrt(6.0 / (2 * C_OUT + 1))
    a = jax.random.uniform(k_a, (2 * C_OUT, 1), minval=-bound_a, maxval=bound_a,
                           dtype=jnp.float32)
    stdv = 1.0 / math.sqrt(C_OUT)
    bias = jax.random.uniform(k_b, (C_OUT,), minval=-stdv, maxval=stdv,
                              dtype=jnp.float32)

    out = gat_conv(x, adj, W, a, bias, alpha=ALPHA)
    out = jax.block_until_ready(out)

    ref = gat_conv_ref(x, adj, W, a, bias, alpha=ALPHA)
    np.testing.assert_allclose(np.asarray(out), np.asarray(ref), rtol=1e-4, atol=1e-4)

    print("KERNEL_OK")
</pallas_src>

<mosaic_0001>
module attributes {stable_mosaic.version = 11 : i64} {
  func.func @_gat_kernel(%arg0: i32, %arg1: memref<1x16x8xf32, #tpu.memory_space<vmem>>, %arg2: memref<8x128xf32, #tpu.memory_space<vmem>>, %arg3: memref<8x128xf32, #tpu.memory_space<vmem>>, %arg4: memref<8x2xf32, #tpu.memory_space<vmem>>, %arg5: memref<16x16xf32, #tpu.memory_space<vmem>>, %arg6: memref<16x1xf32, #tpu.memory_space<vmem>>, %arg7: memref<1x128xf32, #tpu.memory_space<vmem>>, %arg8: memref<1x16x128xf32, #tpu.memory_space<vmem>>) attributes {dimension_semantics = [#tpu.dimension_semantics<parallel>], iteration_bounds = array<i64: 2>, scalar_prefetch = 0 : i64, scratch_operands = 0 : i64, tpu.core_type = #tpu.core_type<tc>, window_params = [{transform_indices = @transform_0, window_bounds = array<i64: 1, 16, 8>}, {pipeline_mode = #tpu.pipeline_mode<synchronous>, transform_indices = @transform_1, window_bounds = array<i64: 8, 128>}, {pipeline_mode = #tpu.pipeline_mode<synchronous>, transform_indices = @transform_2, window_bounds = array<i64: 8, 128>}, {pipeline_mode = #tpu.pipeline_mode<synchronous>, transform_indices = @transform_3, window_bounds = array<i64: 8, 2>}, {pipeline_mode = #tpu.pipeline_mode<synchronous>, transform_indices = @transform_4, window_bounds = array<i64: 16, 16>}, {pipeline_mode = #tpu.pipeline_mode<synchronous>, transform_indices = @transform_5, window_bounds = array<i64: 16, 1>}, {pipeline_mode = #tpu.pipeline_mode<synchronous>, transform_indices = @transform_6, window_bounds = array<i64: 1, 128>}, {transform_indices = @transform_7, window_bounds = array<i64: 1, 16, 128>}]} {
    %c0 = arith.constant 0 : index
    %c0_0 = arith.constant 0 : index
    %c0_1 = arith.constant 0 : index
    %0 = vector.load %arg1[%c0, %c0_0, %c0_1] : memref<1x16x8xf32, #tpu.memory_space<vmem>>, vector<1x16x8xf32>
    %1 = vector.shape_cast %0 : vector<1x16x8xf32> to vector<16x8xf32>
    %c0_2 = arith.constant 0 : index
    %c0_3 = arith.constant 0 : index
    %2 = vector.load %arg2[%c0_2, %c0_3] : memref<8x128xf32, #tpu.memory_space<vmem>>, vector<8x128xf32>
    %cst = arith.constant dense<0.000000e+00> : vector<16x128xf32>
    %3 = tpu.matmul %1, %2, %cst {dimension_numbers = #tpu.dot_dimension_numbers<[1], [0], [0], [1], [0, 0, 1, 1], [], []>} : vector<16x8xf32>, vector<8x128xf32>, vector<16x128xf32> -> vector<16x128xf32>
    %c0_4 = arith.constant 0 : index
    %c0_5 = arith.constant 0 : index
    %4 = vector.load %arg3[%c0_4, %c0_5] : memref<8x128xf32, #tpu.memory_space<vmem>>, vector<8x128xf32>
    %cst_6 = arith.constant dense<0.000000e+00> : vector<16x128xf32>
    %5 = tpu.matmul %1, %4, %cst_6 {dimension_numbers = #tpu.dot_dimension_numbers<[1], [0], [0], [1], [0, 0, 1, 1], [], []>} : vector<16x8xf32>, vector<8x128xf32>, vector<16x128xf32> -> vector<16x128xf32>
    %c0_7 = arith.constant 0 : index
    %c0_8 = arith.constant 0 : index
    %6 = vector.load %arg4[%c0_7, %c0_8] : memref<8x2xf32, #tpu.memory_space<vmem>>, vector<8x2xf32>
    %cst_9 = arith.constant dense<0.000000e+00> : vector<16x2xf32>
    %7 = tpu.matmul %1, %6, %cst_9 {dimension_numbers = #tpu.dot_dimension_numbers<[1], [0], [0], [1], [0, 0, 1, 1], [], []>} : vector<16x8xf32>, vector<8x2xf32>, vector<16x2xf32> -> vector<16x2xf32>
    %8 = tpu.iota {dimensions = array<i32: 1>} : vector<16x2xi32>
    %c0_i32 = arith.constant 0 : i32
    %9 = vector.broadcast %c0_i32 : i32 to vector<16x2xi32>
    %10 = arith.cmpi eq, %8, %9 : vector<16x2xi32>
    %cst_10 = arith.constant 1.000000e+00 : f32
    %11 = vector.broadcast %cst_10 : f32 to vector<16x2xf32>
    %12 = arith.select %10, %7, %11 : vector<16x2xi1>, vector<16x2xf32>
    %c1_i32 = arith.constant 1 : i32
    %13 = vector.broadcast %c1_i32 : i32 to vector<16x2xi32>
    %14 = arith.cmpi eq, %8, %13 : vector<16x2xi32>
    %cst_11 = arith.constant 1.000000e+00 : f32
    %15 = vector.broadcast %cst_11 : f32 to vector<16x2xf32>
    %16 = arith.select %14, %7, %15 : vector<16x2xi1>, vector<16x2xf32>
    %cst_12 = arith.constant dense<0.000000e+00> : vector<16x16xf32>
    %17 = tpu.matmul %12, %16, %cst_12 {dimension_numbers = #tpu.dot_dimension_numbers<[1], [1], [0], [0], [0, 0, 1, 0], [], []>} : vector<16x2xf32>, vector<16x2xf32>, vector<16x16xf32> -> vector<16x16xf32>
    %cst_13 = arith.constant 2.000000e-01 : f32
    %18 = vector.broadcast %cst_13 : f32 to vector<16x16xf32>
    %19 = arith.mulf %18, %17 : vector<16x16xf32>
    %20 = arith.maximumf %17, %19 : vector<16x16xf32>
    %c0_14 = arith.constant 0 : index
    %c0_15 = arith.constant 0 : index
    %21 = vector.load %arg5[%c0_14, %c0_15] : memref<16x16xf32, #tpu.memory_space<vmem>>, vector<16x16xf32>
    %cst_16 = arith.constant 0.000000e+00 : f32
    %22 = vector.broadcast %cst_16 : f32 to vector<16x16xf32>
    %23 = arith.cmpf ogt, %21, %22 : vector<16x16xf32>
    %cst_17 = arith.constant -9.000000e+15 : f32
    %24 = vector.broadcast %cst_17 : f32 to vector<16x16xf32>
    %25 = arith.select %23, %20, %24 : vector<16x16xi1>, vector<16x16xf32>
    %cst_18 = arith.constant dense<0xFF800000> : vector<16xf32>
    %26 = vector.multi_reduction <maximumf>, %25, %cst_18 [1] : vector<16x16xf32> to vector<16xf32>
    %27 = vector.shape_cast %26 : vector<16xf32> to vector<16x1xf32>
    %28 = vector.broadcast %27 : vector<16x1xf32> to vector<16x16xf32>
    %29 = arith.subf %25, %28 : vector<16x16xf32>
    %30 = math.exp %29 : vector<16x16xf32>
    %cst_19 = arith.constant dense<0.000000e+00> : vector<16xf32>
    %31 = vector.multi_reduction <add>, %30, %cst_19 [1] : vector<16x16xf32> to vector<16xf32>
    %32 = vector.shape_cast %31 : vector<16xf32> to vector<16x1xf32>
    %33 = tpu.reciprocal %32 {approx = true} : vector<16x1xf32> -> vector<16x1xf32>
    %34 = arith.mulf %32, %33 : vector<16x1xf32>
    %cst_20 = arith.constant 2.000000e+00 : f32
    %35 = vector.broadcast %cst_20 : f32 to vector<16x1xf32>
    %36 = arith.subf %35, %34 : vector<16x1xf32>
    %37 = arith.mulf %33, %36 : vector<16x1xf32>
    %38 = vector.broadcast %37 : vector<16x1xf32> to vector<16x16xf32>
    %39 = arith.mulf %30, %38 : vector<16x16xf32>
    %cst_21 = arith.constant dense<0.000000e+00> : vector<16xf32>
    %40 = vector.multi_reduction <add>, %7, %cst_21 [1] : vector<16x2xf32> to vector<16xf32>
    %41 = vector.shape_cast %40 : vector<16xf32> to vector<16x1xf32>
    %cst_22 = arith.constant 2.000000e-01 : f32
    %42 = vector.broadcast %cst_22 : f32 to vector<16x1xf32>
    %43 = arith.mulf %42, %41 : vector<16x1xf32>
    %44 = arith.maximumf %41, %43 : vector<16x1xf32>
    %c0_23 = arith.constant 0 : index
    %c0_24 = arith.constant 0 : index
    %45 = vector.load %arg6[%c0_23, %c0_24] : memref<16x1xf32, #tpu.memory_space<vmem>>, vector<16x1xf32>
    %cst_25 = arith.constant 0.000000e+00 : f32
    %46 = vector.broadcast %cst_25 : f32 to vector<16x1xf32>
    %47 = arith.cmpf ogt, %45, %46 : vector<16x1xf32>
    %cst_26 = arith.constant -9.000000e+15 : f32
    %48 = vector.broadcast %cst_26 : f32 to vector<16x1xf32>
    %49 = arith.select %47, %44, %48 : vector<16x1xi1>, vector<16x1xf32>
    %50 = arith.subf %49, %27 : vector<16x1xf32>
    %51 = math.exp %50 : vector<16x1xf32>
    %52 = arith.mulf %51, %37 : vector<16x1xf32>
    %cst_27 = arith.constant dense<0.000000e+00> : vector<16x128xf32>
    %53 = tpu.matmul %39, %3, %cst_27 {dimension_numbers = #tpu.dot_dimension_numbers<[1], [0], [0], [1], [0, 0, 1, 1], [], []>} : vector<16x16xf32>, vector<16x128xf32>, vector<16x128xf32> -> vector<16x128xf32>
    %54 = vector.broadcast %52 : vector<16x1xf32> to vector<16x128xf32>
    %55 = arith.mulf %54, %5 : vector<16x128xf32>
    %56 = arith.addf %53, %55 : vector<16x128xf32>
    %c0_28 = arith.constant 0 : index
    %c0_29 = arith.constant 0 : index
    %57 = vector.load %arg7[%c0_28, %c0_29] : memref<1x128xf32, #tpu.memory_space<vmem>>, vector<1x128xf32>
    %58 = vector.broadcast %57 : vector<1x128xf32> to vector<16x128xf32>
    %59 = arith.addf %56, %58 : vector<16x128xf32>
    %c0_30 = arith.constant 0 : index
    %c0_31 = arith.constant 0 : index
    %c0_32 = arith.constant 0 : index
    %60 = vector.load %arg8[%c0_30, %c0_31, %c0_32] : memref<1x16x128xf32, #tpu.memory_space<vmem>>, vector<1x16x128xf32>
    %61 = vector.shape_cast %60 : vector<1x16x128xf32> to vector<16x128xf32>
    %62 = vector.shape_cast %59 : vector<16x128xf32> to vector<1x16x128xf32>
    tpu.vector_store %arg8[%c0_30, %c0_31, %c0_32], %62 {strides = array<i32>} : memref<1x16x128xf32, #tpu.memory_space<vmem>>, vector<1x16x128xf32>,
    return
  }
  func.func @transform_0(%arg0: i32) -> (i32, i32, i32) {
    %c0_i32 = arith.constant 0 : i32
    %c0_i32_0 = arith.constant 0 : i32
    %c0_i32_1 = arith.constant 0 : i32
    return %arg0, %c0_i32, %c0_i32_0 : i32, i32, i32
  }
  func.func @transform_1(%arg0: i32) -> (i32, i32) {
    %c0_i32 = arith.constant 0 : i32
    %c0_i32_0 = arith.constant 0 : i32
    %c0_i32_1 = arith.constant 0 : i32
    return %c0_i32, %c0_i32_0 : i32, i32
  }
  func.func @transform_2(%arg0: i32) -> (i32, i32) {
    %c0_i32 = arith.constant 0 : i32
    %c0_i32_0 = arith.constant 0 : i32
    %c0_i32_1 = arith.constant 0 : i32
    return %c0_i32, %c0_i32_0 : i32, i32
  }
  func.func @transform_3(%arg0: i32) -> (i32, i32) {
    %c0_i32 = arith.constant 0 : i32
    %c0_i32_0 = arith.constant 0 : i32
    %c0_i32_1 = arith.constant 0 : i32
    return %c0_i32, %c0_i32_0 : i32, i32
  }
  func.func @transform_4(%arg0: i32) -> (i32, i32) {
    %c0_i32 = arith.constant 0 : i32
    %c0_i32_0 = arith.constant 0 : i32
    %c0_i32_1 = arith.constant 0 : i32
    return %c0_i32, %c0_i32_0 : i32, i32
  }
  func.func @transform_5(%arg0: i32) -> (i32, i32) {
    %c0_i32 = arith.constant 0 : i32
    %c0_i32_0 = arith.constant 0 : i32
    %c0_i32_1 = arith.constant 0 : i32
    return %c0_i32, %c0_i32_0 : i32, i32
  }
  func.func @transform_6(%arg0: i32) -> (i32, i32) {
    %c0_i32 = arith.constant 0 : i32
    %c0_i32_0 = arith.constant 0 : i32
    %c0_i32_1 = arith.constant 0 : i32
    return %c0_i32, %c0_i32_0 : i32, i32
  }
  func.func @transform_7(%arg0: i32) -> (i32, i32, i32) {
    %c0_i32 = arith.constant 0 : i32
    %c0_i32_0 = arith.constant 0 : i32
    %c0_i32_1 = arith.constant 0 : i32
    return %arg0, %c0_i32, %c0_i32_0 : i32, i32, i32
  }
}

</mosaic_0001>

<llo_original>
// kernel: tpu_custom_call.1
$region0: #{tpu_custom_call.1}
  #allocation0 [shape = 'u32[]', space=smem, size = 0x4, offset = 0x4, fixed_abs, tag = 'smem constant byte address 0x4 - core index']
  #allocation1 [shape = 'u32[144,128]{1,0:T(1,128)}', space=vmem, size = 0x12000, scoped, tag = 'internal scratch']
  %s0 = inlined_call_operand.vmem [shape: f32[2,16,8], index: 0, kind: input, shape index: {}]
  %s1 = inlined_call_operand.vmem [shape: f32[8,128], index: 1, kind: input, shape index: {}]
  %s2 = inlined_call_operand.vmem [shape: f32[8,128], index: 2, kind: input, shape index: {}]
  %s3 = inlined_call_operand.vmem [shape: f32[8,2], index: 3, kind: input, shape index: {}]
  %s4 = inlined_call_operand.vmem [shape: f32[16,16], index: 4, kind: input, shape index: {}]
  %s5 = inlined_call_operand.vmem [shape: f32[16,1], index: 5, kind: input, shape index: {}]
  %s6 = inlined_call_operand.vmem [shape: f32[1,128], index: 6, kind: input, shape index: {}]
  %s7 = inlined_call_operand.hbm [shape: f32[2,16,128], index: 7, kind: output, shape index: {}]
  %s8 = sld [smem:[#allocation0]]
  $region61: #{tpu_custom_call.1} parent=0
    _
  %s10 = ssub.s32 1, %s8
  %s11 = scalar_select 0, %s10, %s8
  $region1: #{tpu_custom_call.1} parent=0
    #allocation2 [shape = 'u8[16384]{0}', space=vmem, size = 0x4000, scoped, tag = 'output window, operand 0']
    #allocation3 [shape = 's32[2]{0}', space=sflag, size = 0x8, scoped, tag = 'scoped memory for tpu_custom_call.1']
    %12 = vsyncpa [#allocation3], 0
    %s13 = scalar_lea.sflag [#allocation3], 1
    %14 = vsyncpa %s13, 0
    loop: start=0, step=1, limit=4
    $region2: #{tpu_custom_call.1} parent=1 // loop_pre_header
      _
    $region3: #{tpu_custom_call.1} parent=1 // loop_header
      %s16 = sphi 0, %s20
      %p17 = scmp.ge.s32.totalorder %s16, 4
      %s26 = sphi 0, %s28
      %s29 = sphi 0, %s26
      %s30 = sphi 0, %s29
      %s46 = sphi 0, %s30
      %s50 = sphi 0, %s50
      %s52 = sphi 0, %s50
      %s53 = sphi 0, %s52
      %s67 = sphi 0, %s53
      %s71 = sphi 0, %s71
      %s73 = sphi 0, %s71
      %s74 = sphi 0, %s73
      %s88 = sphi 0, %s74
      %s92 = sphi 0, %s92
      %s94 = sphi 0, %s92
      %s95 = sphi 0, %s94
      %s109 = sphi 0, %s95
      %s113 = sphi 0, %s113
      %s115 = sphi 0, %s113
      %s116 = sphi 0, %s115
      %s130 = sphi 0, %s116
      %s134 = sphi 0, %s134
      %s136 = sphi 0, %s134
      %s137 = sphi 0, %s136
      %s151 = sphi 0, %s137
      %s155 = sphi 0, %s155
      %s157 = sphi 0, %s155
      %s158 = sphi 0, %s157
      %s172 = sphi 0, %s158
      %s178 = sphi 0, %s180
      %s181 = sphi 0, %s178
      %s182 = sphi 0, %s181
      %s198 = sphi 0, %s182
    $region4: #{tpu_custom_call.1} parent=1 // loop_header_branch
      %19 = sbr.rel (%p17) target = $region8
    $region5: #{tpu_custom_call.1} parent=1 // loop_body
      %s21 = ssub.s32 %s16, 1
      %s22 = ssub.s32 %s16, 2
      %s23 = sadd.s32 %s16, 1
      %s24 = ssub.s32 %s16, %s23
      %p25 = scmp.eq.s32.totalorder %s24, 0
      %s27 = sadd.s32 %s26, 1
      %s28 = scalar_select %p25, %s26, %s27
      %p31 = pneg %p25
      %p32 = scmp.eq.s32.totalorder %s16, 1
      %p33 = por %p31, %p32
      %p34 = scmp.ne.s32.totalorder %s26, %s29
      %p35 = scmp.eq.s32.totalorder %s16, 0
      %p36 = por %p34, %p35
      %p37 = scmp.ne.s32.totalorder %s26, %s29
      %p38 = scmp.eq.s32.totalorder %s21, 1
      %p39 = por %p37, %p38
      %p40 = scmp.ne.s32.totalorder %s29, %s30
      %p41 = scmp.eq.s32.totalorder %s21, 0
      %p42 = por %p40, %p41
      %p43 = scmp.ne.s32.totalorder %s29, %s30
      %p44 = scmp.eq.s32.totalorder %s22, 1
      %p45 = por %p43, %p44
      %p47 = scmp.ne.s32.totalorder %s30, %s46
      %p48 = scmp.eq.s32.totalorder %s22, 0
      %p49 = por %p47, %p48
      %s51 = sadd.s32 %s50, 1
      %p54 = scmp.eq.s32.totalorder %s16, 1
      %p55 = scmp.ne.s32.totalorder %s50, %s52
      %p56 = scmp.eq.s32.totalorder %s16, 0
      %p57 = por %p55, %p56
      %p58 = scmp.ne.s32.totalorder %s50, %s52
      %p59 = scmp.eq.s32.totalorder %s21, 1
      %p60 = por %p58, %p59
      %p61 = scmp.ne.s32.totalorder %s52, %s53
      %p62 = scmp.eq.s32.totalorder %s21, 0
      %p63 = por %p61, %p62
      %p64 = scmp.ne.s32.totalorder %s52, %s53
      %p65 = scmp.eq.s32.totalorder %s22, 1
      %p66 = por %p64, %p65
      %p68 = scmp.ne.s32.totalorder %s53, %s67
      %p69 = scmp.eq.s32.totalorder %s22, 0
      %p70 = por %p68, %p69
      %s72 = sadd.s32 %s71, 1
      %p75 = scmp.eq.s32.totalorder %s16, 1
      %p76 = scmp.ne.s32.totalorder %s71, %s73
      %p77 = scmp.eq.s32.totalorder %s16, 0
      %p78 = por %p76, %p77
      %p79 = scmp.ne.s32.totalorder %s71, %s73
      %p80 = scmp.eq.s32.totalorder %s21, 1
      %p81 = por %p79, %p80
      %p82 = scmp.ne.s32.totalorder %s73, %s74
      %p83 = scmp.eq.s32.totalorder %s21, 0
      %p84 = por %p82, %p83
      %p85 = scmp.ne.s32.totalorder %s73, %s74
      %p86 = scmp.eq.s32.totalorder %s22, 1
      %p87 = por %p85, %p86
      %p89 = scmp.ne.s32.totalorder %s74, %s88
      %p90 = scmp.eq.s32.totalorder %s22, 0
      %p91 = por %p89, %p90
      %s93 = sadd.s32 %s92, 1
      %p96 = scmp.eq.s32.totalorder %s16, 1
      %p97 = scmp.ne.s32.totalorder %s92, %s94
      %p98 = scmp.eq.s32.totalorder %s16, 0
      %p99 = por %p97, %p98
      %p100 = scmp.ne.s32.totalorder %s92, %s94
      %p101 = scmp.eq.s32.totalorder %s21, 1
      %p102 = por %p100, %p101
      %p103 = scmp.ne.s32.totalorder %s94, %s95
      %p104 = scmp.eq.s32.totalorder %s21, 0
      %p105 = por %p103, %p104
      %p106 = scmp.ne.s32.totalorder %s94, %s95
      %p107 = scmp.eq.s32.totalorder %s22, 1
      %p108 = por %p106, %p107
      %p110 = scmp.ne.s32.totalorder %s95, %s109
      %p111 = scmp.eq.s32.totalorder %s22, 0
      %p112 = por %p110, %p111
      %s114 = sadd.s32 %s113, 1
      %p117 = scmp.eq.s32.totalorder %s16, 1
      %p118 = scmp.ne.s32.totalorder %s113, %s115
      %p119 = scmp.eq.s32.totalorder %s16, 0
      %p120 = por %p118, %p119
      %p121 = scmp.ne.s32.totalorder %s113, %s115
      %p122 = scmp.eq.s32.totalorder %s21, 1
      %p123 = por %p121, %p122
      %p124 = scmp.ne.s32.totalorder %s115, %s116
      %p125 = scmp.eq.s32.totalorder %s21, 0
      %p126 = por %p124, %p125
      %p127 = scmp.ne.s32.totalorder %s115, %s116
      %p128 = scmp.eq.s32.totalorder %s22, 1
      %p129 = por %p127, %p128
      %p131 = scmp.ne.s32.totalorder %s116, %s130
      %p132 = scmp.eq.s32.totalorder %s22, 0
      %p133 = por %p131, %p132
      %s135 = sadd.s32 %s134, 1
      %p138 = scmp.eq.s32.totalorder %s16, 1
      %p139 = scmp.ne.s32.totalorder %s134, %s136
      %p140 = scmp.eq.s32.totalorder %s16, 0
      %p141 = por %p139, %p140
      %p142 = scmp.ne.s32.totalorder %s134, %s136
      %p143 = scmp.eq.s32.totalorder %s21, 1
      %p144 = por %p142, %p143
      %p145 = scmp.ne.s32.totalorder %s136, %s137
      %p146 = scmp.eq.s32.totalorder %s21, 0
      %p147 = por %p145, %p146
      %p148 = scmp.ne.s32.totalorder %s136, %s137
      %p149 = scmp.eq.s32.totalorder %s22, 1
      %p150 = por %p148, %p149
      %p152 = scmp.ne.s32.totalorder %s137, %s151
      %p153 = scmp.eq.s32.totalorder %s22, 0
      %p154 = por %p152, %p153
      %s156 = sadd.s32 %s155, 1
      %p159 = scmp.eq.s32.totalorder %s16, 1
      %p160 = scmp.ne.s32.totalorder %s155, %s157
      %p161 = scmp.eq.s32.totalorder %s16, 0
      %p162 = por %p160, %p161
      %p163 = scmp.ne.s32.totalorder %s155, %s157
      %p164 = scmp.eq.s32.totalorder %s21, 1
      %p165 = por %p163, %p164
      %p166 = scmp.ne.s32.totalorder %s157, %s158
      %p167 = scmp.eq.s32.totalorder %s21, 0
      %p168 = por %p166, %p167
      %p169 = scmp.ne.s32.totalorder %s157, %s158
      %p170 = scmp.eq.s32.totalorder %s22, 1
      %p171 = por %p169, %p170
      %p173 = scmp.ne.s32.totalorder %s158, %s172
      %p174 = scmp.eq.s32.totalorder %s22, 0
      %p175 = por %p173, %p174
      %s176 = ssub.s32 %s16, %s23
      %p177 = scmp.eq.s32.totalorder %s176, 0
      %s179 = sadd.s32 %s178, 1
      %s180 = scalar_select %p177, %s178, %s179
      %p183 = pneg %p177
      %p184 = scmp.eq.s32.totalorder %s16, 1
      %p185 = por %p183, %p184
      %p186 = scmp.ne.s32.totalorder %s178, %s181
      %p187 = scmp.eq.s32.totalorder %s16, 0
      %p188 = por %p186, %p187
      %p189 = scmp.ne.s32.totalorder %s178, %s181
      %p190 = scmp.eq.s32.totalorder %s21, 1
      %p191 = por %p189, %p190
      %p192 = scmp.ne.s32.totalorder %s181, %s182
      %p193 = scmp.eq.s32.totalorder %s21, 0
      %p194 = por %p192, %p193
      %p195 = scmp.ne.s32.totalorder %s181, %s182
      %p196 = scmp.eq.s32.totalorder %s22, 1
      %p197 = por %p195, %p196
      %p199 = scmp.ne.s32.totalorder %s182, %s198
      %p200 = scmp.eq.s32.totalorder %s22, 0
      %p201 = por %p199, %p200
      %p202 = scmp.le.s32.totalorder 1, %s16
      %p203 = scmp.lt.s32.totalorder %s16, 3
      %p204 = pnand %p202, %p203
      %p205 = pneg %p204
      // Predicated region
      $region9: #{tpu_custom_call.1} parent=5 // pred_check
        _
      $region10: #{tpu_custom_call.1} parent=5 // pred_check_branch
        %207 = sbr.rel (%p204) target = $region12
      $region11: #{tpu_custom_call.1} parent=5 // pred_region
        %s208 = ssub.s32 %s16, 1
        // Predicated region
        $region13: #{tpu_custom_call.1} parent=11 // pred_check
          %p209 = pneg %p63
        $region14: #{tpu_custom_call.1} parent=11 // pred_check_branch
          %211 = sbr.rel (%p209) target = $region16
        $region15: #{tpu_custom_call.1} parent=11 // pred_region
          _
        $region16: #{tpu_custom_call.1} parent=11 // pred_fallthru
          _
        // Predicated region
        $region17: #{tpu_custom_call.1} parent=11 // pred_check
          %p212 = pneg %p84
        $region18: #{tpu_custom_call.1} parent=11 // pred_check_branch
          %214 = sbr.rel (%p212) target = $region20
        $region19: #{tpu_custom_call.1} parent=11 // pred_region
          _
        $region20: #{tpu_custom_call.1} parent=11 // pred_fallthru
          _
        // Predicated region
        $region21: #{tpu_custom_call.1} parent=11 // pred_check
          %p215 = pneg %p105
        $region22: #{tpu_custom_call.1} parent=11 // pred_check_branch
          %217 = sbr.rel (%p215) target = $region24
        $region23: #{tpu_custom_call.1} parent=11 // pred_region
          _
        $region24: #{tpu_custom_call.1} parent=11 // pred_fallthru
          _
        // Predicated region
        $region25: #{tpu_custom_call.1} parent=11 // pred_check
          %p218 = pneg %p126
        $region26: #{tpu_custom_call.1} parent=11 // pred_check_branch
          %220 = sbr.rel (%p218) target = $region28
        $region27: #{tpu_custom_call.1} parent=11 // pred_region
          _
        $region28: #{tpu_custom_call.1} parent=11 // pred_fallthru
          _
        // Predicated region
        $region29: #{tpu_custom_call.1} parent=11 // pred_check
          %p221 = pneg %p147
        $region30: #{tpu_custom_call.1} parent=11 // pred_check_branch
          %223 = sbr.rel (%p221) target = $region32
        $region31: #{tpu_custom_call.1} parent=11 // pred_region
          _
        $region32: #{tpu_custom_call.1} parent=11 // pred_fallthru
          _
        // Predicated region
        $region33: #{tpu_custom_call.1} parent=11 // pred_check
          %p224 = pneg %p168
        $region34: #{tpu_custom_call.1} parent=11 // pred_check_branch
          %226 = sbr.rel (%p224) target = $region36
        $region35: #{tpu_custom_call.1} parent=11 // pred_region
          _
        $region36: #{tpu_custom_call.1} parent=11 // pred_fallthru
          _
      $region12: #{tpu_custom_call.1} parent=5 // pred_fallthru
        _
      %p227 = scmp.lt.s32.totalorder %s16, 2
      // Predicated region
      $region37: #{tpu_custom_call.1} parent=5 // pred_check
        %p228 = pneg %p227
      $region38: #{tpu_custom_call.1} parent=5 // pred_check_branch
        %230 = sbr.rel (%p228) target = $region40
      $region39: #{tpu_custom_call.1} parent=5 // pred_region
        // Predicated region
        $region41: #{tpu_custom_call.1} parent=39 // pred_check
          %p231 = pneg %p36
        $region42: #{tpu_custom_call.1} parent=39 // pred_check_branch
          %233 = sbr.rel (%p231) target = $region44
        $region43: #{tpu_custom_call.1} parent=39 // pred_region
          %p234 = scmp.lt.s32.totalorder %s16, 1
          %s235 = scalar_select %p234, %s16, 1
          %s236 = smul.addr %s235, 2
          %s237 = smul.addr %s236, 8
          %s238 = scalar_lea.vmem %s0, %s237
        $region44: #{tpu_custom_call.1} parent=39 // pred_fallthru
          _
      $region40: #{tpu_custom_call.1} parent=5 // pred_fallthru
        _
      %p239 = scmp.le.s32.totalorder 1, %s16
      %p240 = scmp.lt.s32.totalorder %s16, 3
      %p241 = pnand %p239, %p240
      %p242 = pneg %p241
      // Predicated region
      $region45: #{tpu_custom_call.1} parent=5 // pred_check
        _
      $region46: #{tpu_custom_call.1} parent=5 // pred_check_branch
        %244 = sbr.rel (%p241) target = $region48
      $region47: #{tpu_custom_call.1} parent=5 // pred_region
        %s245 = ssub.s32 %s16, 1
        %p246 = scmp.lt.s32.totalorder %s21, 1
        %s247 = scalar_select %p246, %s21, 1
        %s248 = smul.addr %s247, 2
        %s249 = smul.addr %s248, 8
        %s250 = scalar_lea.vmem %s0, %s249
        %p251 = pneg %p42
        %p252 = pneg %p39
        %p253 = pneg %p63
        %p254 = pneg %p60
        %p255 = pneg %p84
        %p256 = pneg %p81
        %p257 = pneg %p105
        %p258 = pneg %p102
        %p259 = pneg %p126
        %p260 = pneg %p123
        %p261 = pneg %p147
        %p262 = pneg %p144
        %p263 = pneg %p168
        %p264 = pneg %p165
        %p265 = pneg %p194
        %p266 = pneg %p191
        %s267 = sand.u32 %s181, 1
        %s268 = scalar_lea.sflag [#allocation3], %s267
        %s269 = sand.u32 %s181, 1
        %s270 = smul.addr %s269, 16
        %s271 = scalar_lea.vmem [#allocation2], %s270
        %p272 = scmp.lt.s32.totalorder %s21, 1
        %s273 = scalar_select %p272, %s21, 1
        %s274 = smul.addr %s273, 2
        %s275 = smul.addr %s274, 8
        %s276 = scalar_lea.vmem %s0, %s275
        %v277 = vld [vmem:[%s276] sm:$0xff]
        %v278 = vld [vmem:[%s276 + $0x8] sm:$0xff]
        %v279 = vld [vmem:[%s1] sm:$0xff]
        %vm280 = vcmask 64512
        %v282 = vsel %vm280, %v277, 0
        %v285 = vsel %vm280, %v278, 0
        %287 = vmatprep.subr.mxu0 0.0
        %288 = vmatpush1.msra.mxu0 0.0
        %289 = vmatprep.subr.mxu0 0.0
        %290 = vmatpush1.msra.mxu0 0.0
        %291 = vmatprep.subr.mxu0 0.0
        %292 = vmatpush1.msra.mxu0 0.0
        %293 = vmatprep.subr.mxu0 0.0
        %294 = vmatpush1.msra.mxu0 0.0
        %295 = vmatprep.subr.mxu0 0.0
        %296 = vmatpush1.msra.mxu0 0.0
        %297 = vmatprep.subr.mxu0 0.0
        %298 = vmatpush1.msra.mxu0 0.0
        %299 = vmatprep.subr.mxu0 0.0
        %300 = vmatpush1.msra.mxu0 0.0
        %301 = vmatprep.subr.mxu0 0.0
        %302 = vmatpush1.msra.mxu0 0.0
        %303 = vmatprep.subr.mxu0 0.0
        %304 = vmatpush1.msra.mxu0 0.0
        %305 = vmatprep.subr.mxu0 0.0
        %306 = vmatpush1.msra.mxu0 0.0
        %307 = vmatprep.subr.mxu0 0.0
        %308 = vmatpush1.msra.mxu0 0.0
        %309 = vmatprep.subr.mxu0 0.0
        %310 = vmatpush1.msra.mxu0 0.0
        %311 = vmatprep.subr.mxu0 0.0
        %312 = vmatpush1.msra.mxu0 0.0
        %313 = vmatprep.subr.mxu0 0.0
        %314 = vmatpush1.msra.mxu0 0.0
        %315 = vmatprep.subr.mxu0 0.0
        %316 = vmatpush1.msra.mxu0 0.0
        %317 = vmatprep.subr.mxu0 0.0
        %318 = vmatpush1.msra.mxu0 %v279
        %319 = vmatprep.subr.mxu0 0.0
        %320 = vmatpush2.msra.mxu0 0.0
        %321 = vmatprep.subr.mxu0 0.0
        %322 = vmatpush2.msra.mxu0 0.0
        %323 = vmatprep.subr.mxu0 0.0
        %324 = vmatpush2.msra.mxu0 0.0
        %325 = vmatprep.subr.mxu0 0.0
        %326 = vmatpush2.msra.mxu0 0.0
        %327 = vmatprep.subr.mxu0 0.0
        %328 = vmatpush2.msra.mxu0 0.0
        %329 = vmatprep.subr.mxu0 0.0
        %330 = vmatpush2.msra.mxu0 0.0
        %331 = vmatprep.subr.mxu0 0.0
        %332 = vmatpush2.msra.mxu0 0.0
        %333 = vmatprep.subr.mxu0 0.0
        %334 = vmatpush2.msra.mxu0 0.0
        %335 = vmatprep.subr.mxu0 0.0
        %336 = vmatpush2.msra.mxu0 0.0
        %337 = vmatprep.subr.mxu0 0.0
        %338 = vmatpush2.msra.mxu0 0.0
        %339 = vmatprep.subr.mxu0 0.0
        %340 = vmatpush2.msra.mxu0 0.0
        %341 = vmatprep.subr.mxu0 0.0
        %342 = vmatpush2.msra.mxu0 0.0
        %343 = vmatprep.subr.mxu0 0.0
        %344 = vmatpush2.msra.mxu0 0.0
        %345 = vmatprep.subr.mxu0 0.0
        %346 = vmatpush2.msra.mxu0 0.0
        %347 = vmatprep.subr.mxu0 0.0
        %348 = vmatpush2.msra.mxu0 0.0
        %349 = vmatprep.subr.mxu0 0.0
        %350 = vmatpush2.msra.mxu0 0.0
        %351 = vmatprep.mubr.f32.mxu0 0.0
        %352 = vmatmul.mubr.f32.gmra.mxu0 %v282
        %v353 = vpop.f32.mrf.mxu0
        %v354 = vadd.f32 0.0, %v353
        %v355 = vpop.f32.mrf.mxu0
        %356 = vmatprep.mubr.f32.mxu0 0.0
        %357 = vmatmul.mubr.f32.gmra.mxu0 %v285
        %v358 = vpop.f32.mrf.mxu0
        %v359 = vadd.f32 0.0, %v358
        %v360 = vpop.f32.mrf.mxu0
        %361 = vdwg.mxu0
        %v362 = vld [vmem:[%s2] sm:$0xff]
        %363 = vmatprep.subr.mxu0 0.0
        %364 = vmatpush1.msra.mxu0 0.0
        %365 = vmatprep.subr.mxu0 0.0
        %366 = vmatpush1.msra.mxu0 0.0
        %367 = vmatprep.subr.mxu0 0.0
        %368 = vmatpush1.msra.mxu0 0.0
        %369 = vmatprep.subr.mxu0 0.0
        %370 = vmatpush1.msra.mxu0 0.0
        %371 = vmatprep.subr.mxu0 0.0
        %372 = vmatpush1.msra.mxu0 0.0
        %373 = vmatprep.subr.mxu0 0.0
        %374 = vmatpush1.msra.mxu0 0.0
        %375 = vmatprep.subr.mxu0 0.0
        %376 = vmatpush1.msra.mxu0 0.0
        %377 = vmatprep.subr.mxu0 0.0
        %378 = vmatpush1.msra.mxu0 0.0
        %379 = vmatprep.subr.mxu0 0.0
        %380 = vmatpush1.msra.mxu0 0.0
        %381 = vmatprep.subr.mxu0 0.0
        %382 = vmatpush1.msra.mxu0 0.0
        %383 = vmatprep.subr.mxu0 0.0
        %384 = vmatpush1.msra.mxu0 0.0
        %385 = vmatprep.subr.mxu0 0.0
        %386 = vmatpush1.msra.mxu0 0.0
        %387 = vmatprep.subr.mxu0 0.0
        %388 = vmatpush1.msra.mxu0 0.0
        %389 = vmatprep.subr.mxu0 0.0
        %390 = vmatpush1.msra.mxu0 0.0
        %391 = vmatprep.subr.mxu0 0.0
        %392 = vmatpush1.msra.mxu0 0.0
        %393 = vmatprep.subr.mxu0 0.0
        %394 = vmatpush1.msra.mxu0 %v362
        %395 = vmatprep.subr.mxu0 0.0
        %396 = vmatpush2.msra.mxu0 0.0
        %397 = vmatprep.subr.mxu0 0.0
        %398 = vmatpush2.msra.mxu0 0.0
        %399 = vmatprep.subr.mxu0 0.0
        %400 = vmatpush2.msra.mxu0 0.0
        %401 = vmatprep.subr.mxu0 0.0
        %402 = vmatpush2.msra.mxu0 0.0
        %403 = vmatprep.subr.mxu0 0.0
        %404 = vmatpush2.msra.mxu0 0.0
        %405 = vmatprep.subr.mxu0 0.0
        %406 = vmatpush2.msra.mxu0 0.0
        %407 = vmatprep.subr.mxu0 0.0
        %408 = vmatpush2.msra.mxu0 0.0
        %409 = vmatprep.subr.mxu0 0.0
        %410 = vmatpush2.msra.mxu0 0.0
        %411 = vmatprep.subr.mxu0 0.0
        %412 = vmatpush2.msra.mxu0 0.0
        %413 = vmatprep.subr.mxu0 0.0
        %414 = vmatpush2.msra.mxu0 0.0
        %415 = vmatprep.subr.mxu0 0.0
        %416 = vmatpush2.msra.mxu0 0.0
        %417 = vmatprep.subr.mxu0 0.0
        %418 = vmatpush2.msra.mxu0 0.0
        %419 = vmatprep.subr.mxu0 0.0
        %420 = vmatpush2.msra.mxu0 0.0
        %421 = vmatprep.subr.mxu0 0.0
        %422 = vmatpush2.msra.mxu0 0.0
        %423 = vmatprep.subr.mxu0 0.0
        %424 = vmatpush2.msra.mxu0 0.0
        %425 = vmatprep.subr.mxu0 0.0
        %426 = vmatpush2.msra.mxu0 0.0
        %427 = vmatprep.mubr.f32.mxu0 0.0
        %428 = vmatmul.mubr.f32.gmra.mxu0 %v282
        %v429 = vpop.f32.mrf.mxu0
        %v430 = vadd.f32 0.0, %v429
        %v431 = vpop.f32.mrf.mxu0
        %432 = vmatprep.mubr.f32.mxu0 0.0
        %433 = vmatmul.mubr.f32.gmra.mxu0 %v285
        %v434 = vpop.f32.mrf.mxu0
        %v435 = vadd.f32 0.0, %v434
        %v436 = vpop.f32.mrf.mxu0
        %437 = vdwg.mxu0
        %v438 = vld [vmem:[%s3] sm:$0xff]
        %439 = vmatprep.subr.mxu0 0.0
        %440 = vmatpush1.msra.mxu0 0.0
        %441 = vmatprep.subr.mxu0 0.0
        %442 = vmatpush1.msra.mxu0 0.0
        %443 = vmatprep.subr.mxu0 0.0
        %444 = vmatpush1.msra.mxu0 0.0
        %445 = vmatprep.subr.mxu0 0.0
        %446 = vmatpush1.msra.mxu0 0.0
        %447 = vmatprep.subr.mxu0 0.0
        %448 = vmatpush1.msra.mxu0 0.0
        %449 = vmatprep.subr.mxu0 0.0
        %450 = vmatpush1.msra.mxu0 0.0
        %451 = vmatprep.subr.mxu0 0.0
        %452 = vmatpush1.msra.mxu0 0.0
        %453 = vmatprep.subr.mxu0 0.0
        %454 = vmatpush1.msra.mxu0 0.0
        %455 = vmatprep.subr.mxu0 0.0
        %456 = vmatpush1.msra.mxu0 0.0
        %457 = vmatprep.subr.mxu0 0.0
        %458 = vmatpush1.msra.mxu0 0.0
        %459 = vmatprep.subr.mxu0 0.0
        %460 = vmatpush1.msra.mxu0 0.0
        %461 = vmatprep.subr.mxu0 0.0
        %462 = vmatpush1.msra.mxu0 0.0
        %463 = vmatprep.subr.mxu0 0.0
        %464 = vmatpush1.msra.mxu0 0.0
        %465 = vmatprep.subr.mxu0 0.0
        %466 = vmatpush1.msra.mxu0 0.0
        %467 = vmatprep.subr.mxu0 0.0
        %468 = vmatpush1.msra.mxu0 0.0
        %469 = vmatprep.subr.mxu0 0.0
        %470 = vmatpush1.msra.mxu0 %v438
        %471 = vmatprep.subr.mxu0 0.0
        %472 = vmatpush2.msra.mxu0 0.0
        %473 = vmatprep.subr.mxu0 0.0
        %474 = vmatpush2.msra.mxu0 0.0
        %475 = vmatprep.subr.mxu0 0.0
        %476 = vmatpush2.msra.mxu0 0.0
        %477 = vmatprep.subr.mxu0 0.0
        %478 = vmatpush2.msra.mxu0 0.0
        %479 = vmatprep.subr.mxu0 0.0
        %480 = vmatpush2.msra.mxu0 0.0
        %481 = vmatprep.subr.mxu0 0.0
        %482 = vmatpush2.msra.mxu0 0.0
        %483 = vmatprep.subr.mxu0 0.0
        %484 = vmatpush2.msra.mxu0 0.0
        %485 = vmatprep.subr.mxu0 0.0
        %486 = vmatpush2.msra.mxu0 0.0
        %487 = vmatprep.subr.mxu0 0.0
        %488 = vmatpush2.msra.mxu0 0.0
        %489 = vmatprep.subr.mxu0 0.0
        %490 = vmatpush2.msra.mxu0 0.0
        %491 = vmatprep.subr.mxu0 0.0
        %492 = vmatpush2.msra.mxu0 0.0
        %493 = vmatprep.subr.mxu0 0.0
        %494 = vmatpush2.msra.mxu0 0.0
        %495 = vmatprep.subr.mxu0 0.0
        %496 = vmatpush2.msra.mxu0 0.0
        %497 = vmatprep.subr.mxu0 0.0
        %498 = vmatpush2.msra.mxu0 0.0
        %499 = vmatprep.subr.mxu0 0.0
        %500 = vmatpush2.msra.mxu0 0.0
        %501 = vmatprep.subr.mxu0 0.0
        %502 = vmatpush2.msra.mxu0 0.0
        %503 = vmatprep.mubr.f32.mxu0 0.0
        %504 = vmatmul.mubr.f32.gmra.mxu0 %v282
        %v505 = vpop.f32.mrf.mxu0
        %v506 = vadd.f32 0.0, %v505
        %v507 = vpop.f32.mrf.mxu0
        %508 = vmatprep.mubr.f32.mxu0 0.0
        %509 = vmatmul.mubr.f32.gmra.mxu0 %v285
        %v510 = vpop.f32.mrf.mxu0
        %v511 = vadd.f32 0.0, %v510
        %v512 = vpop.f32.mrf.mxu0
        %513 = vdwg.mxu0
        %v514 = vlaneseq
        %v515 = vand.u32 %v514, 127
        %vm516 = vcmp.eq.s32.totalorder %v515, 0
        %v517 = vsel %vm516, %v506, 1.0
        %v518 = vsel %vm516, %v511, 1.0
        %vm519 = vcmp.eq.s32.totalorder %v515, 1
        %v520 = vsel %vm519, %v506, 1.0
        %v521 = vsel %vm519, %v511, 1.0
        %vm522 = vcmask 15360
        %v524 = vsel %vm522, %v517, 0
        %v527 = vsel %vm522, %v518, 0
        %v530 = vsel %vm522, %v520, 0
        %v533 = vsel %vm522, %v521, 0
        %535 = vmatprep.subr.mxu0 0.0
        %536 = vmatpush1.xpose.msra.mxu0 0.0
        %537 = vmatprep.subr.mxu0 0.0
        %538 = vmatpush1.xpose.msra.mxu0 0.0
        %539 = vmatprep.subr.mxu0 0.0
        %540 = vmatpush1.xpose.msra.mxu0 0.0
        %541 = vmatprep.subr.mxu0 0.0
        %542 = vmatpush1.xpose.msra.mxu0 0.0
        %543 = vmatprep.subr.mxu0 0.0
        %544 = vmatpush1.xpose.msra.mxu0 0.0
        %545 = vmatprep.subr.mxu0 0.0
        %546 = vmatpush1.xpose.msra.mxu0 0.0
        %547 = vmatprep.subr.mxu0 0.0
        %548 = vmatpush1.xpose.msra.mxu0 0.0
        %549 = vmatprep.subr.mxu0 0.0
        %550 = vmatpush1.xpose.msra.mxu0 0.0
        %551 = vmatprep.subr.mxu0 0.0
        %552 = vmatpush1.xpose.msra.mxu0 0.0
        %553 = vmatprep.subr.mxu0 0.0
        %554 = vmatpush1.xpose.msra.mxu0 0.0
        %555 = vmatprep.subr.mxu0 0.0
        %556 = vmatpush1.xpose.msra.mxu0 0.0
        %557 = vmatprep.subr.mxu0 0.0
        %558 = vmatpush1.xpose.msra.mxu0 0.0
        %559 = vmatprep.subr.mxu0 0.0
        %560 = vmatpush1.xpose.msra.mxu0 0.0
        %561 = vmatprep.subr.mxu0 0.0
        %562 = vmatpush1.xpose.msra.mxu0 0.0
        %563 = vmatprep.subr.mxu0 0.0
        %564 = vmatpush1.xpose.msra.mxu0 %v533
        %565 = vmatprep.subr.mxu0 0.0
        %566 = vmatpush1.xpose.msra.mxu0 %v530
        %567 = vmatprep.subr.mxu0 0.0
        %568 = vmatpush2.xpose.msra.mxu0 0.0
        %569 = vmatprep.subr.mxu0 0.0
        %570 = vmatpush2.xpose.msra.mxu0 0.0
        %571 = vmatprep.subr.mxu0 0.0
        %572 = vmatpush2.xpose.msra.mxu0 0.0
        %573 = vmatprep.subr.mxu0 0.0
        %574 = vmatpush2.xpose.msra.mxu0 0.0
        %575 = vmatprep.subr.mxu0 0.0
        %576 = vmatpush2.xpose.msra.mxu0 0.0
        %577 = vmatprep.subr.mxu0 0.0
        %578 = vmatpush2.xpose.msra.mxu0 0.0
        %579 = vmatprep.subr.mxu0 0.0
        %580 = vmatpush2.xpose.msra.mxu0 0.0
        %581 = vmatprep.subr.mxu0 0.0
        %582 = vmatpush2.xpose.msra.mxu0 0.0
        %583 = vmatprep.subr.mxu0 0.0
        %584 = vmatpush2.xpose.msra.mxu0 0.0
        %585 = vmatprep.subr.mxu0 0.0
        %586 = vmatpush2.xpose.msra.mxu0 0.0
        %587 = vmatprep.subr.mxu0 0.0
        %588 = vmatpush2.xpose.msra.mxu0 0.0
        %589 = vmatprep.subr.mxu0 0.0
        %590 = vmatpush2.xpose.msra.mxu0 0.0
        %591 = vmatprep.subr.mxu0 0.0
        %592 = vmatpush2.xpose.msra.mxu0 0.0
        %593 = vmatprep.subr.mxu0 0.0
        %594 = vmatpush2.xpose.msra.mxu0 0.0
        %595 = vmatprep.subr.mxu0 0.0
        %596 = vmatpush2.xpose.msra.mxu0 0.0
        %597 = vmatprep.subr.mxu0 0.0
        %598 = vmatpush2.xpose.msra.mxu0 0.0
        %599 = vmatprep.mubr.f32.mxu0 0.0
        %600 = vmatmul.mubr.f32.gmra.mxu0 %v524
        %v601 = vpop.f32.mrf.mxu0
        %v602 = vadd.f32 0.0, %v601
        %v603 = vpop.f32.mrf.mxu0
        %604 = vmatprep.mubr.f32.mxu0 0.0
        %605 = vmatmul.mubr.f32.gmra.mxu0 %v527
        %v606 = vpop.f32.mrf.mxu0
        %v607 = vadd.f32 0.0, %v606
        %v608 = vpop.f32.mrf.mxu0
        %609 = vdwg.mxu0
        %v610 = vmul.f32 %v602, 0.2
        %v611 = vmul.f32 %v607, 0.2
        %v612 = vmax.f32 %v602, %v610
        %v613 = vmax.f32 %v607, %v611
        %v614 = vld [vmem:[%s4] sm:$0xff]
        %v615 = vld [vmem:[%s4 + $0x8] sm:$0xff]
        %vm616 = vcmp.gt.f32.partialorder %v614, 0.0
        %vm617 = vcmp.gt.f32.partialorder %v615, 0.0
        %v618 = vsel %vm616, %v612, -9e+15
        %v619 = vsel %vm617, %v613, -9e+15
        %vm620 = vcmask 130048
        %v621 = vsel %vm620, %v618, -inf
        %622 = vmax.xlane.f32.xlu0 %v621
        %v623 = vpop.xlane.xlu0 %622
        %v624 = vsel %vm620, %v619, -inf
        %625 = vmax.xlane.f32.xlu0 %v624
        %v626 = vpop.xlane.xlu0 %625
        %v627 = vsub.f32 %v618, %v623
        %v628 = vsub.f32 %v619, %v626
        %v629 = vmul.f32 %v627, 1.442695
        %v630 = vpow.pop %v629
        %v631 = vmul.f32 %v628, 1.442695
        %v632 = vpow.pop %v631
        %v633 = vsel %vm620, %v630, 0.0
        %634 = vadd.xlane.f32.xlu0 %v633
        %v635 = vpop.xlane.xlu0 %634
        %v636 = vsel %vm620, %v632, 0.0
        %637 = vadd.xlane.f32.xlu0 %v636
        %v638 = vpop.xlane.xlu0 %637
        %v639 = vrcp.pop %v635
        %v640 = vrcp.pop %v638
        %v641 = vmul.f32 %v635, %v639
        %v642 = vmul.f32 %v638, %v640
        %v643 = vsub.f32 2.0, %v641
        %v644 = vsub.f32 2.0, %v642
        %v645 = vmul.f32 %v639, %v643
        %v646 = vmul.f32 %v640, %v644
        %v647 = vmul.f32 %v630, %v645
        %v648 = vmul.f32 %v632, %v646
        %v649 = vsel %vm522, %v506, 0.0
        %650 = vadd.xlane.f32.xlu0 %v649
        %v651 = vpop.xlane.xlu0 %650
        %v652 = vsel %vm522, %v511, 0.0
        %653 = vadd.xlane.f32.xlu0 %v652
        %v654 = vpop.xlane.xlu0 %653
        %v655 = vmul.f32 %v651, 0.2
        %v656 = vmul.f32 %v654, 0.2
        %v657 = vmax.f32 %v651, %v655
        %v658 = vmax.f32 %v654, %v656
        %v659 = vld [vmem:[%s5] sm:$0xff]
        %v660 = vld [vmem:[%s5 + $0x8] sm:$0xff]
        %vm661 = vcmp.gt.f32.partialorder %v659, 0.0
        %vm662 = vcmp.gt.f32.partialorder %v660, 0.0
        %v663 = vsel %vm661, %v657, -9e+15
        %v664 = vsel %vm662, %v658, -9e+15
        %v665 = vsub.f32 %v663, %v623
        %v666 = vsub.f32 %v664, %v626
        %v667 = vmul.f32 %v665, 1.442695
        %v668 = vpow.pop %v667
        %v669 = vmul.f32 %v666, 1.442695
        %v670 = vpow.pop %v669
        %v671 = vmul.f32 %v668, %v645
        %v672 = vmul.f32 %v670, %v646
        %674 = vset.pattern.permute.xlu0 0
        %675 = vperm.xlu0 %674, %v671
        %v676 = vpop.permute.xlu0 %675
        %679 = vset.pattern.permute.xlu0 0
        %680 = vperm.xlu0 %679, %v672
        %v681 = vpop.permute.xlu0 %680
        %v683 = vmul.f32 %v676, %v430
        %v684 = vmul.f32 %v681, %v435
        %v686 = vsel %vm620, %v647, 0
        %v689 = vsel %vm620, %v648, 0
        %691 = vmatprep.subr.mxu0 0.0
        %692 = vmatpush1.msra.mxu0 0.0
        %693 = vmatprep.subr.mxu0 0.0
        %694 = vmatpush1.msra.mxu0 0.0
        %695 = vmatprep.subr.mxu0 0.0
        %696 = vmatpush1.msra.mxu0 0.0
        %697 = vmatprep.subr.mxu0 0.0
        %698 = vmatpush1.msra.mxu0 0.0
        %699 = vmatprep.subr.mxu0 0.0
        %700 = vmatpush1.msra.mxu0 0.0
        %701 = vmatprep.subr.mxu0 0.0
        %702 = vmatpush1.msra.mxu0 0.0
        %703 = vmatprep.subr.mxu0 0.0
        %704 = vmatpush1.msra.mxu0 0.0
        %705 = vmatprep.subr.mxu0 0.0
        %706 = vmatpush1.msra.mxu0 0.0
        %707 = vmatprep.subr.mxu0 0.0
        %708 = vmatpush1.msra.mxu0 0.0
        %709 = vmatprep.subr.mxu0 0.0
        %710 = vmatpush1.msra.mxu0 0.0
        %711 = vmatprep.subr.mxu0 0.0
        %712 = vmatpush1.msra.mxu0 0.0
        %713 = vmatprep.subr.mxu0 0.0
        %714 = vmatpush1.msra.mxu0 0.0
        %715 = vmatprep.subr.mxu0 0.0
        %716 = vmatpush1.msra.mxu0 0.0
        %717 = vmatprep.subr.mxu0 0.0
        %718 = vmatpush1.msra.mxu0 0.0
        %719 = vmatprep.subr.mxu0 0.0
        %720 = vmatpush1.msra.mxu0 %v359
        %721 = vmatprep.subr.mxu0 0.0
        %722 = vmatpush1.msra.mxu0 %v354
        %723 = vmatprep.subr.mxu0 0.0
        %724 = vmatpush2.msra.mxu0 0.0
        %725 = vmatprep.subr.mxu0 0.0
        %726 = vmatpush2.msra.mxu0 0.0
        %727 = vmatprep.subr.mxu0 0.0
        %728 = vmatpush2.msra.mxu0 0.0
        %729 = vmatprep.subr.mxu0 0.0
        %730 = vmatpush2.msra.mxu0 0.0
        %731 = vmatprep.subr.mxu0 0.0
        %732 = vmatpush2.msra.mxu0 0.0
        %733 = vmatprep.subr.mxu0 0.0
        %734 = vmatpush2.msra.mxu0 0.0
        %735 = vmatprep.subr.mxu0 0.0
        %736 = vmatpush2.msra.mxu0 0.0
        %737 = vmatprep.subr.mxu0 0.0
        %738 = vmatpush2.msra.mxu0 0.0
        %739 = vmatprep.subr.mxu0 0.0
        %740 = vmatpush2.msra.mxu0 0.0
        %741 = vmatprep.subr.mxu0 0.0
        %742 = vmatpush2.msra.mxu0 0.0
        %743 = vmatprep.subr.mxu0 0.0
        %744 = vmatpush2.msra.mxu0 0.0
        %745 = vmatprep.subr.mxu0 0.0
        %746 = vmatpush2.msra.mxu0 0.0
        %747 = vmatprep.subr.mxu0 0.0
        %748 = vmatpush2.msra.mxu0 0.0
        %749 = vmatprep.subr.mxu0 0.0
        %750 = vmatpush2.msra.mxu0 0.0
        %751 = vmatprep.subr.mxu0 0.0
        %752 = vmatpush2.msra.mxu0 0.0
        %753 = vmatprep.subr.mxu0 0.0
        %754 = vmatpush2.msra.mxu0 0.0
        %755 = vmatprep.mubr.f32.mxu0 0.0
        %756 = vmatmul.mubr.f32.gmra.mxu0 %v686
        %v757 = vpop.f32.mrf.mxu0
        %v758 = vadd.f32 %v683, %v757
        %v759 = vpop.f32.mrf.mxu0
        %760 = vmatprep.mubr.f32.mxu0 0.0
        %761 = vmatmul.mubr.f32.gmra.mxu0 %v689
        %v762 = vpop.f32.mrf.mxu0
        %v763 = vadd.f32 %v684, %v762
        %v764 = vpop.f32.mrf.mxu0
        %765 = vdwg.mxu0
        %v766 = vld [vmem:[%s6] sm:$0x1]
        %v768 = vlaneseq
        %v769 = vshrl.u32 %v768, 7
        %v770 = vsub.s32 0, %v769
        %v771 = vrot.slane %v766, %v770
        %v773 = vadd.f32 %v758, %v771
        %v774 = vadd.f32 %v763, %v771
        %775 = vst [vmem:[%s271] sm:$0xff] %v773
        %776 = vst [vmem:[%s271 + $0x8] sm:$0xff] %v774
        %s777 = sand.u32 %s181, 1
        %s778 = scalar_lea.sflag [#allocation3], %s777
        %s779 = sand.u32 %s181, 1
        %s780 = smul.addr %s779, 16
        %s781 = scalar_lea.vmem [#allocation2], %s780
        // Predicated region
        $region49: #{tpu_custom_call.1} parent=47 // pred_check
          %p782 = pneg %p191
        $region50: #{tpu_custom_call.1} parent=47 // pred_check_branch
          %784 = sbr.rel (%p782) target = $region52
        $region51: #{tpu_custom_call.1} parent=47 // pred_region
          %s786 = ssub.s32 256, 256
          %787 = vsyncadd %s778, %s786
          %s788 = smul.addr %s21, 2
          %s789 = smul.addr %s788, 128
          %s790 = scalar_lea.hbm %s7, %s789
          %s791 = sshll.u32 %s781, 4
          %s792 = int_to_ptr.vmem [resolvable:$true] %s791
          %797 = dma.vmem_to_hbm [thread:$0]  %s792, 256, %s790, %s778, 128, 128, 8
        $region52: #{tpu_custom_call.1} parent=47 // pred_fallthru
          _
      $region48: #{tpu_custom_call.1} parent=5 // pred_fallthru
        _
      %p798 = scmp.le.s32.totalorder 2, %s16
      // Predicated region
      $region53: #{tpu_custom_call.1} parent=5 // pred_check
        %p799 = pneg %p798
      $region54: #{tpu_custom_call.1} parent=5 // pred_check_branch
        %801 = sbr.rel (%p799) target = $region56
      $region55: #{tpu_custom_call.1} parent=5 // pred_region
        %s802 = ssub.s32 %s16, 2
        // Predicated region
        $region57: #{tpu_custom_call.1} parent=55 // pred_check
          %p803 = pneg %p197
        $region58: #{tpu_custom_call.1} parent=55 // pred_check_branch
          %805 = sbr.rel (%p803) target = $region60
        $region59: #{tpu_custom_call.1} parent=55 // pred_region
          %s806 = sand.u32 %s182, 1
          %s807 = scalar_lea.sflag [#allocation3], %s806
          %s808 = sand.u32 %s182, 1
          %s809 = smul.addr %s808, 16
          %s810 = scalar_lea.vmem [#allocation2], %s809
          %811 = dma.done %s807, 256
        $region60: #{tpu_custom_call.1} parent=55 // pred_fallthru
          _
      $region56: #{tpu_custom_call.1} parent=5 // pred_fallthru
        _
    $region6: #{tpu_custom_call.1} parent=1 // loop_footer
      %s20 = sadd.s32 1, %s16
    $region7: #{tpu_custom_call.1} parent=1 // loop_footer_branch
      %15 = sbr.rel target = $region3
    $region8: #{tpu_custom_call.1} parent=1 // loop_exit
      _
    %812 = vsyncpa [#allocation3], 1
    %s813 = scalar_lea.sflag [#allocation3], 1
    %814 = vsyncpa %s813, 1

</llo_original>
